<compile_context>
chip_gen: v6e
topology: v6e:2x2x1
jax: 0.10.0
libtpu: 0.0.40
codegen_flags: <defaults>
</compile_context>

<pallas_src>
import jax
import jax.numpy as jnp
from jax.experimental import pallas as pl
from jax.experimental.pallas import tpu as pltpu


# ----------------------------------------------------------------------------
# helpers
# ----------------------------------------------------------------------------
def _pick_row_tile(m):
    """Largest MXU-friendly row tile that divides m (falls back to full m)."""
    for t in (512, 256, 128):
        if m % t == 0:
            return t
    return m


def _pick_head_block(bh):
    """How many (batch*head) attention problems to batch per grid step."""
    for t in (8, 4, 2):
        if bh % t == 0:
            return t
    return 1


def _vmem_limit(block_bytes):
    # Every BlockSpec input/output is double-buffered; add margin, clamp so the
    # value is valid on all generations (v7x has 64 MiB physical VMEM).
    return int(min(max(2 * block_bytes + (4 << 20), 32 << 20), 60 << 20))


# ----------------------------------------------------------------------------
# Kernel 1 & 3: row-tiled matmul + bias  (out = x @ W + b), W is (in, out).
# ----------------------------------------------------------------------------
def _matmul_bias_kernel(x_ref, w_ref, b_ref, o_ref):
    acc = jnp.dot(x_ref[...], w_ref[...], preferred_element_type=jnp.float32)
    o_ref[...] = (acc + b_ref[...]).astype(o_ref.dtype)


def _matmul_bias(x2d, w, b2d, out_dtype):
    m, k = x2d.shape
    _, n = w.shape
    tm = _pick_row_tile(m)
    est = (tm * k * x2d.dtype.itemsize
           + k * n * w.dtype.itemsize
           + n * b2d.dtype.itemsize
           + tm * n * jnp.dtype(out_dtype).itemsize)
    return pl.pallas_call(
        _matmul_bias_kernel,
        out_shape=jax.ShapeDtypeStruct((m, n), out_dtype),
        grid=(m // tm,),
        in_specs=[
            pl.BlockSpec((tm, k), lambda i: (i, 0)),    # activations (row tiled)
            pl.BlockSpec((k, n), lambda i: (0, 0)),     # weight (resident)
            pl.BlockSpec((1, n), lambda i: (0, 0)),     # bias
        ],
        out_specs=pl.BlockSpec((tm, n), lambda i: (i, 0)),
        compiler_params=pltpu.CompilerParams(
            dimension_semantics=("parallel",),
            vmem_limit_bytes=_vmem_limit(est)),
    )(x2d, w, b2d)


# ----------------------------------------------------------------------------
# Kernel 2: head-batched scaled-dot-product attention.
# q/k/v are (B*H, N, Dh) bf16; the 1/sqrt(Dh) scale is already folded into q.
# ----------------------------------------------------------------------------
def _attention_kernel(q_ref, k_ref, v_ref, mask_ref, o_ref):
    q = q_ref[...]                                   # (hb, N, Dh)
    k = k_ref[...]
    v = v_ref[...]

    s = jnp.einsum("bnd,bmd->bnm", q, k, preferred_element_type=jnp.float32)
    s = s + mask_ref[...][None, :, :]                # additive attn_mask
    s = s - jnp.max(s, axis=-1, keepdims=True)       # stable softmax (f32)
    p = jnp.exp(s)
    denom = jnp.sum(p, axis=-1, keepdims=True)
    p = p * pl.reciprocal(denom, approx=True)        # EUP slot, not VALU divide

    ctx = jnp.einsum("bnm,bmd->bnd", p.astype(v.dtype), v,
                     preferred_element_type=jnp.float32)
    o_ref[...] = ctx.astype(o_ref.dtype)


def _attention(q, k, v, mask, out_dtype):
    bh, n, dh = q.shape
    hb = _pick_head_block(bh)
    est = (3 * hb * n * dh * q.dtype.itemsize        # q/k/v blocks
           + n * n * mask.dtype.itemsize             # mask
           + hb * n * dh * jnp.dtype(out_dtype).itemsize
           + hb * n * n * 4)                         # f32 score scratch
    return pl.pallas_call(
        _attention_kernel,
        out_shape=jax.ShapeDtypeStruct((bh, n, dh), out_dtype),
        grid=(bh // hb,),
        in_specs=[
            pl.BlockSpec((hb, n, dh), lambda i: (i, 0, 0)),
            pl.BlockSpec((hb, n, dh), lambda i: (i, 0, 0)),
            pl.BlockSpec((hb, n, dh), lambda i: (i, 0, 0)),
            pl.BlockSpec((n, n), lambda i: (0, 0)),
        ],
        out_specs=pl.BlockSpec((hb, n, dh), lambda i: (i, 0, 0)),
        compiler_params=pltpu.CompilerParams(
            dimension_semantics=("parallel",),
            vmem_limit_bytes=_vmem_limit(est)),
    )(q, k, v, mask)


# ----------------------------------------------------------------------------
# Forward wrapper (parameter adaptation + 3 Pallas calls).
# ----------------------------------------------------------------------------
def masked_lora_mha_forward(x, params, attn_mask, *, num_heads, expert_id=0,
                            apply_lora=True, compute_dtype=jnp.bfloat16):
    """Forward pass of MultiHeadAttention_MaskedLoRA.

    x:         (B, N, C) float32
    attn_mask: (N, N)    float32 (added to attention logits)
    """
    B, N, C = x.shape
    dh = C // num_heads
    scale = dh ** (-0.5)

    # ---------------- parameter adaptation (plain JAX glue, f32) ------------
    qkv_w = params["qkv_w"]                              # (3C, C), torch layout
    qkv_b = params["qkv_b"]                              # (3C,)
    q_w, k_w, v_w = qkv_w[:C], qkv_w[C:2 * C], qkv_w[2 * C:]

    if apply_lora:
        k_w = k_w + params["lora_B_k"] @ params["lora_A_k"]
        v_w = v_w + params["lora_B_v"] @ params["lora_A_v"]

    # Masked scaling in learned subspaces (python bools, like the torch module).
    for mask_on, scale_p, space in zip(params["scaling_mask"][expert_id],
                                       params["scale_param"][expert_id],
                                       params["space"][expert_id]):
        if not mask_on:
            break
        ssz = space.shape[1]
        cropped = scale_p[:ssz, :ssz]
        cropped = cropped @ cropped.T
        delta = cropped - jnp.eye(ssz, dtype=cropped.dtype)
        k_w = k_w + k_w @ space @ delta @ space.T
        v_w = v_w + v_w @ space @ delta @ space.T

    bq, bk, bv = qkv_b[:C], qkv_b[C:2 * C], qkv_b[2 * C:]
    # Fold the 1/sqrt(Dh) scale into the q projection (weight + bias).
    q_w = q_w * scale
    bq = bq * scale

    # (in, out) layout + bf16: no transposes inside the kernels, native MXU dtype.
    w_qkv = jnp.concatenate([q_w, k_w, v_w], axis=0).T.astype(compute_dtype)  # (C, 3C)
    b_qkv = jnp.concatenate([bq, bk, bv]).reshape(1, 3 * C).astype(jnp.float32)
    w_proj = params["proj_w"].T.astype(compute_dtype)                          # (C, C)
    b_proj = params["proj_b"].reshape(1, C).astype(jnp.float32)

    # ------------------------- kernel 1: fused QKV ---------------------------
    x2d = x.reshape(B * N, C).astype(compute_dtype)
    qkv = _matmul_bias(x2d, w_qkv, b_qkv, compute_dtype)          # (B*N, 3C)

    # layout plumbing (wrapper/XLA): (B*N, 3C) -> 3 x (B*H, N, Dh)
    def to_heads(t):
        return (t.reshape(B, N, num_heads, dh)
                 .transpose(0, 2, 1, 3)
                 .reshape(B * num_heads, N, dh))

    q = to_heads(qkv[:, :C])
    k = to_heads(qkv[:, C:2 * C])
    v = to_heads(qkv[:, 2 * C:])

    # ------------------------- kernel 2: attention ---------------------------
    # TODO(synk): for long sequences switch to an online-softmax (flash) loop
    # over key tiles instead of materializing the full (N, N) score block.
    ctx = _attention(q, k, v, attn_mask.astype(jnp.float32), compute_dtype)

    ctx2d = (ctx.reshape(B, num_heads, N, dh)
                .transpose(0, 2, 1, 3)
                .reshape(B * N, C))

    # --------------------- kernel 3: output projection -----------------------
    out = _matmul_bias(ctx2d, w_proj, b_proj, x.dtype)            # (B*N, C)
    return out.reshape(B, N, C)


# ----------------------------------------------------------------------------
# Pure-JAX reference (mirrors the PyTorch forward, f32) for validation.
# ----------------------------------------------------------------------------
def reference_forward(x, params, attn_mask, *, num_heads, expert_id=0,
                      apply_lora=True):
    B, N, C = x.shape
    dh = C // num_heads
    scale = dh ** (-0.5)

    qkv_w = params["qkv_w"]
    qkv_b = params["qkv_b"]
    q_w, k_w, v_w = qkv_w[:C], qkv_w[C:2 * C], qkv_w[2 * C:]
    if apply_lora:
        k_w = k_w + params["lora_B_k"] @ params["lora_A_k"]
        v_w = v_w + params["lora_B_v"] @ params["lora_A_v"]
    for mask_on, scale_p, space in zip(params["scaling_mask"][expert_id],
                                       params["scale_param"][expert_id],
                                       params["space"][expert_id]):
        if not mask_on:
            break
        ssz = space.shape[1]
        cropped = scale_p[:ssz, :ssz]
        cropped = cropped @ cropped.T
        delta = cropped - jnp.eye(ssz, dtype=cropped.dtype)
        k_w = k_w + k_w @ space @ delta @ space.T
        v_w = v_w + v_w @ space @ delta @ space.T

    w_full = jnp.concatenate([q_w, k_w, v_w], axis=0)
    qkv = x @ w_full.T + qkv_b                            # (B, N, 3C)
    qkv = qkv.reshape(B, N, 3, num_heads, dh).transpose(2, 0, 3, 1, 4)
    q, k, v = qkv[0], qkv[1], qkv[2]                      # (B, H, N, Dh)
    attn = jnp.einsum("bhnd,bhmd->bhnm", q, k) * scale
    attn = attn + attn_mask[None, None]
    attn = jax.nn.softmax(attn, axis=-1)
    ctx = jnp.einsum("bhnm,bhmd->bhnd", attn, v)
    ctx = ctx.transpose(0, 2, 1, 3).reshape(B, N, C)
    return ctx @ params["proj_w"].T + params["proj_b"]


# ----------------------------------------------------------------------------
def make_params(key, dim, num_heads, lora_rank, scale_size):
    ks = jax.random.split(key, 12)
    std = 0.05
    params = {
        "qkv_w": std * jax.random.normal(ks[0], (3 * dim, dim), jnp.float32),
        "qkv_b": std * jax.random.normal(ks[1], (3 * dim,), jnp.float32),
        "proj_w": std * jax.random.normal(ks[2], (dim, dim), jnp.float32),
        "proj_b": std * jax.random.normal(ks[3], (dim,), jnp.float32),
        # LoRA (nn.Linear weight shapes: A: (rank, dim), B: (dim, rank))
        "lora_A_k": std * jax.random.normal(ks[4], (lora_rank, dim), jnp.float32),
        "lora_B_k": std * jax.random.normal(ks[5], (dim, lora_rank), jnp.float32),
        "lora_A_v": std * jax.random.normal(ks[6], (lora_rank, dim), jnp.float32),
        "lora_B_v": std * jax.random.normal(ks[7], (dim, lora_rank), jnp.float32),
    }
    # Masked-scale state (only expert 0 populated; first slot enabled).
    eye = jnp.eye(dim, dtype=jnp.float32)
    space0 = std * jax.random.normal(ks[8], (dim, scale_size), jnp.float32)
    scale0 = eye + std * jax.random.normal(ks[9], (dim, dim), jnp.float32)
    params["space"] = [[space0, jnp.ones((1, 1), jnp.float32)]] + \
                      [[jnp.ones((1, 1)), jnp.ones((1, 1))] for _ in range(9)]
    params["scale_param"] = [[scale0, eye]] + [[eye, eye] for _ in range(9)]
    params["scaling_mask"] = [[True, False]] + [[False, False] for _ in range(9)]
    return params


if __name__ == "__main__":
    B, N, C = 2, 8, 32
    num_heads = 4
    lora_rank = 4
    scale_size = 8

    key = jax.random.PRNGKey(0)
    kx, km, kp = jax.random.split(key, 3)

    x = jax.random.normal(kx, (B, N, C), jnp.float32)
    attn_mask = 0.1 * jax.random.normal(km, (N, N), jnp.float32)
    params = make_params(kp, C, num_heads, lora_rank, scale_size)

    out = masked_lora_mha_forward(x, params, attn_mask,
                                  num_heads=num_heads, expert_id=0,
                                  apply_lora=True)
    out = jax.block_until_ready(out)

    ref = reference_forward(x, params, attn_mask,
                            num_heads=num_heads, expert_id=0,
                            apply_lora=True)
    assert out.shape == (B, N, C)
    # bf16 MXU inputs (f32 accumulation / f32 softmax) vs. a pure-f32 reference.
    assert jnp.allclose(out, ref, atol=2e-2, rtol=2e-2), \
        f"max diff {jnp.max(jnp.abs(out - ref))}"

    print("KERNEL_OK")
</pallas_src>

<mosaic_0001>
module attributes {stable_mosaic.version = 11 : i64} {
  func.func @_matmul_bias_kernel(%arg0: i32, %arg1: memref<16x32xbf16, #tpu.memory_space<vmem>>, %arg2: memref<32x96xbf16, #tpu.memory_space<vmem>>, %arg3: memref<1x96xf32, #tpu.memory_space<vmem>>, %arg4: memref<16x96xbf16, #tpu.memory_space<vmem>>) attributes {dimension_semantics = [#tpu.dimension_semantics<parallel>], iteration_bounds = array<i64: 1>, scalar_prefetch = 0 : i64, scratch_operands = 0 : i64, tpu.core_type = #tpu.core_type<tc>, window_params = [{transform_indices = @transform_0, window_bounds = array<i64: 16, 32>}, {pipeline_mode = #tpu.pipeline_mode<synchronous>, transform_indices = @transform_1, window_bounds = array<i64: 32, 96>}, {pipeline_mode = #tpu.pipeline_mode<synchronous>, transform_indices = @transform_2, window_bounds = array<i64: 1, 96>}, {transform_indices = @transform_3, window_bounds = array<i64: 16, 96>}]} {
    %c0 = arith.constant 0 : index
    %c0_0 = arith.constant 0 : index
    %0 = vector.load %arg1[%c0, %c0_0] : memref<16x32xbf16, #tpu.memory_space<vmem>>, vector<16x32xbf16>
    %c0_1 = arith.constant 0 : index
    %c0_2 = arith.constant 0 : index
    %1 = vector.load %arg2[%c0_1, %c0_2] : memref<32x96xbf16, #tpu.memory_space<vmem>>, vector<32x96xbf16>
    %cst = arith.constant dense<0.000000e+00> : vector<16x96xf32>
    %2 = tpu.matmul %0, %1, %cst {dimension_numbers = #tpu.dot_dimension_numbers<[1], [0], [0], [1], [0, 0, 1, 1], [], []>} : vector<16x32xbf16>, vector<32x96xbf16>, vector<16x96xf32> -> vector<16x96xf32>
    %c0_3 = arith.constant 0 : index
    %c0_4 = arith.constant 0 : index
    %3 = vector.load %arg3[%c0_3, %c0_4] : memref<1x96xf32, #tpu.memory_space<vmem>>, vector<1x96xf32>
    %4 = vector.broadcast %3 : vector<1x96xf32> to vector<16x96xf32>
    %5 = arith.addf %2, %4 : vector<16x96xf32>
    %6 = arith.truncf %5 : vector<16x96xf32> to vector<16x96xbf16>
    %c0_5 = arith.constant 0 : index
    %c0_6 = arith.constant 0 : index
    %7 = vector.load %arg4[%c0_5, %c0_6] : memref<16x96xbf16, #tpu.memory_space<vmem>>, vector<16x96xbf16>
    tpu.vector_store %arg4[%c0_5, %c0_6], %6 {strides = array<i32>} : memref<16x96xbf16, #tpu.memory_space<vmem>>, vector<16x96xbf16>,
    return
  }
  func.func @transform_0(%arg0: i32) -> (i32, i32) {
    %c0_i32 = arith.constant 0 : i32
    %c0_i32_0 = arith.constant 0 : i32
    return %arg0, %c0_i32 : i32, i32
  }
  func.func @transform_1(%arg0: i32) -> (i32, i32) {
    %c0_i32 = arith.constant 0 : i32
    %c0_i32_0 = arith.constant 0 : i32
    %c0_i32_1 = arith.constant 0 : i32
    return %c0_i32, %c0_i32_0 : i32, i32
  }
  func.func @transform_2(%arg0: i32) -> (i32, i32) {
    %c0_i32 = arith.constant 0 : i32
    %c0_i32_0 = arith.constant 0 : i32
    %c0_i32_1 = arith.constant 0 : i32
    return %c0_i32, %c0_i32_0 : i32, i32
  }
  func.func @transform_3(%arg0: i32) -> (i32, i32) {
    %c0_i32 = arith.constant 0 : i32
    %c0_i32_0 = arith.constant 0 : i32
    return %arg0, %c0_i32 : i32, i32
  }
}

</mosaic_0001>

<llo_original>
// kernel: tpu_custom_call.1
$region0: #{tpu_custom_call.1}
  #allocation0 [shape = 'u32[]', space=smem, size = 0x4, offset = 0x4, fixed_abs, tag = 'smem constant byte address 0x4 - core index']
  #allocation1 [shape = 'u32[144,128]{1,0:T(1,128)}', space=vmem, size = 0x12000, scoped, tag = 'internal scratch']
  %s0 = inlined_call_operand.hbm [shape: bf16[16,32], index: 0, kind: input, shape index: {}]
  %s1 = inlined_call_operand.hbm [shape: bf16[32,96], index: 1, kind: input, shape index: {}]
  %s2 = inlined_call_operand.vmem [shape: f32[1,96], index: 2, kind: input, shape index: {}]
  %s3 = inlined_call_operand.hbm [shape: bf16[16,96], index: 3, kind: output, shape index: {}]
  %s4 = sld [smem:[#allocation0]]
  $region30: #{tpu_custom_call.1} parent=0
    _
  %s6 = ssub.s32 1, %s4
  %s7 = scalar_select 0, %s6, %s4
  $region1: #{tpu_custom_call.1} parent=0
    #allocation2 [shape = 'u8[4096]{0}', space=vmem, size = 0x1000, scoped, tag = 'input window, operand 0, single buffered']
    #allocation3 [shape = 's32[1]{0}', space=sflag, size = 0x4, scoped, tag = 'scoped memory for tpu_custom_call.1']
    #allocation4 [shape = 's32[1]{0}', space=sflag, size = 0x4, scoped, tag = 'scoped memory for tpu_custom_call.1']
    #allocation5 [shape = 'u8[8192]{0}', space=vmem, size = 0x2000, scoped, tag = 'input window, operand 1, single buffered']
    #allocation6 [shape = 's32[1]{0}', space=sflag, size = 0x4, scoped, tag = 'scoped memory for tpu_custom_call.1']
    #allocation7 [shape = 'u8[4096]{0}', space=vmem, size = 0x1000, scoped, tag = 'output window, operand 0, single buffered']
    %8 = vsyncpa [#allocation3], 0
    %9 = vsyncpa [#allocation6], 0
    %10 = vsyncpa [#allocation4], 0
    // Predicated region
    $region2: #{tpu_custom_call.1} parent=1 // pred_check
      _
    $region3: #{tpu_custom_call.1} parent=1 // pred_check_branch
      %12 = sbr.rel (0) target = $region5
    $region4: #{tpu_custom_call.1} parent=1 // pred_region
      %s14 = ssub.s32 128, 128
      %15 = vsyncadd [#allocation3], %s14
      %s16 = sshll.u32 [#allocation2], 4
      %s17 = int_to_ptr.vmem [resolvable:$true] %s16
      %22 = dma.hbm_to_vmem [thread:$0]  %s0, 128, %s17, [#allocation3], 64, 64, 4
    $region5: #{tpu_custom_call.1} parent=1 // pred_fallthru
      _
    // Predicated region
    $region6: #{tpu_custom_call.1} parent=1 // pred_check
      _
    $region7: #{tpu_custom_call.1} parent=1 // pred_check_branch
      %24 = sbr.rel (0) target = $region9
    $region8: #{tpu_custom_call.1} parent=1 // pred_region
      %s26 = ssub.s32 256, 256
      %27 = vsyncadd [#allocation6], %s26
      %s28 = sshll.u32 [#allocation5], 4
      %s29 = int_to_ptr.vmem [resolvable:$true] %s28
      %34 = dma.hbm_to_vmem [thread:$0]  %s1, 256, %s29, [#allocation6], 64, 64, 4
    $region9: #{tpu_custom_call.1} parent=1 // pred_fallthru
      _
    // Predicated region
    $region10: #{tpu_custom_call.1} parent=1 // pred_check
      _
    $region11: #{tpu_custom_call.1} parent=1 // pred_check_branch
      %36 = sbr.rel (0) target = $region13
    $region12: #{tpu_custom_call.1} parent=1 // pred_region
      _
    $region13: #{tpu_custom_call.1} parent=1 // pred_fallthru
      _
    // Predicated region
    $region14: #{tpu_custom_call.1} parent=1 // pred_check
      _
    $region15: #{tpu_custom_call.1} parent=1 // pred_check_branch
      %38 = sbr.rel (0) target = $region17
    $region16: #{tpu_custom_call.1} parent=1 // pred_region
      %39 = dma.done [#allocation3], 128
    $region17: #{tpu_custom_call.1} parent=1 // pred_fallthru
      _
    // Predicated region
    $region18: #{tpu_custom_call.1} parent=1 // pred_check
      _
    $region19: #{tpu_custom_call.1} parent=1 // pred_check_branch
      %41 = sbr.rel (0) target = $region21
    $region20: #{tpu_custom_call.1} parent=1 // pred_region
      %42 = dma.done [#allocation6], 256
    $region21: #{tpu_custom_call.1} parent=1 // pred_fallthru
      _
    %v44 = vld [vmem:[#allocation2] sm:$0xf]
    %v45 = vld [vmem:[#allocation2 + $0x4] sm:$0xf]
    %v46 = vld [vmem:[#allocation5] sm:$0xf]
    %v47 = vld [vmem:[#allocation5 + $0x4] sm:$0xf]
    %v48 = vld [vmem:[#allocation5 + $0x8] sm:$0xf]
    %v49 = vld [vmem:[#allocation5 + $0xc] sm:$0xf]
    %v50 = vld [vmem:[%s2] sm:$0x1]
    %v52 = vlaneseq
    %v53 = vshrl.u32 %v52, 7
    %v54 = vsub.s32 0, %v53
    %v55 = vrot.slane %v50, %v54
    %v59 = vunpack.c.l.b16 %v44
    %v60 = vunpack.c.l.b16 %v45
    %v61 = vpack.c.b16 %v60, %v59
    %v66 = vunpack.c.l.b16 %v46
    %v67 = vunpack.c.l.b16 %v47
    %v68 = vunpack.c.l.b16 %v48
    %v69 = vunpack.c.l.b16 %v49
    %v70 = vpack.c.b16 %v67, %v66
    %v71 = vpack.c.b16 %v69, %v68
    %vm74 = vcmask 261120
    %v76 = vsel %vm74, %v61, 0
    %78 = vmatprep.subr.bf16.mxu0 0
    %79 = vmatpush1.bf16.msra.mxu0 0
    %80 = vmatprep.subr.bf16.mxu0 0
    %81 = vmatpush1.bf16.msra.mxu0 0
    %82 = vmatprep.subr.bf16.mxu0 0
    %83 = vmatpush1.bf16.msra.mxu0 0
    %84 = vmatprep.subr.bf16.mxu0 0
    %85 = vmatpush1.bf16.msra.mxu0 0
    %86 = vmatprep.subr.bf16.mxu0 0
    %87 = vmatpush1.bf16.msra.mxu0 0
    %88 = vmatprep.subr.bf16.mxu0 0
    %89 = vmatpush1.bf16.msra.mxu0 0
    %90 = vmatprep.subr.bf16.mxu0 0
    %91 = vmatpush1.bf16.msra.mxu0 %v71
    %92 = vmatprep.subr.bf16.mxu0 0
    %93 = vmatpush1.bf16.msra.mxu0 %v70
    %94 = vmatprep.subr.bf16.mxu0 0
    %95 = vmatpush2.bf16.msra.mxu0 0
    %96 = vmatprep.subr.bf16.mxu0 0
    %97 = vmatpush2.bf16.msra.mxu0 0
    %98 = vmatprep.subr.bf16.mxu0 0
    %99 = vmatpush2.bf16.msra.mxu0 0
    %100 = vmatprep.subr.bf16.mxu0 0
    %101 = vmatpush2.bf16.msra.mxu0 0
    %102 = vmatprep.subr.bf16.mxu0 0
    %103 = vmatpush2.bf16.msra.mxu0 0
    %104 = vmatprep.subr.bf16.mxu0 0
    %105 = vmatpush2.bf16.msra.mxu0 0
    %106 = vmatprep.subr.bf16.mxu0 0
    %107 = vmatpush2.bf16.msra.mxu0 0
    %108 = vmatprep.subr.bf16.mxu0 0
    %109 = vmatpush2.bf16.msra.mxu0 0
    %110 = vmatprep.mubr.bf16.mxu0 0
    %111 = vmatmul.mubr.bf16.gmra.mxu0 %v76
    %v112 = vpop.f32.mrf.mxu0
    %v113 = vadd.f32 %v55, %v112
    %v114 = vpop.f32.mrf.mxu0
    %v115 = vpop.f32.mrf.mxu0
    %v116 = vadd.f32 %v55, %v115
    %v117 = vpop.f32.mrf.mxu0
    %118 = vdwg.mxu0
    %v119 = vpack.c.bf16 %v116, %v113
    %v121 = vunpack.c.l.b16 %v119
    %v122 = vunpack.c.h.b16 %v119
    %v123 = vpack.c.b16 %v121, %v121
    %v124 = vpack.c.b16 %v122, %v122
    %vm127 = vcmask 781312
    %128 = vst.msk [vmem:[#allocation7] sm:$0xf] %vm127, %v123
    %129 = vst.msk [vmem:[#allocation7 + $0x4] sm:$0xf] %vm127, %v124
    // Predicated region
    $region22: #{tpu_custom_call.1} parent=1 // pred_check
      _
    $region23: #{tpu_custom_call.1} parent=1 // pred_check_branch
      %131 = sbr.rel (0) target = $region25
    $region24: #{tpu_custom_call.1} parent=1 // pred_region
      %s133 = ssub.s32 128, 128
      %134 = vsyncadd [#allocation4], %s133
      %s135 = sshll.u32 [#allocation7], 4
      %s136 = int_to_ptr.vmem [resolvable:$true] %s135
      %141 = dma.vmem_to_hbm [thread:$0]  %s136, 128, %s3, [#allocation4], 64, 64, 4
    $region25: #{tpu_custom_call.1} parent=1 // pred_fallthru
      _
    // Predicated region
    $region26: #{tpu_custom_call.1} parent=1 // pred_check
      _
    $region27: #{tpu_custom_call.1} parent=1 // pred_check_branch
      %143 = sbr.rel (0) target = $region29
    $region28: #{tpu_custom_call.1} parent=1 // pred_region
      %144 = dma.done [#allocation4], 128
    $region29: #{tpu_custom_call.1} parent=1 // pred_fallthru
      _
    %145 = vsyncpa [#allocation3], 1
    %146 = vsyncpa [#allocation6], 1
    %147 = vsyncpa [#allocation4], 1

</llo_original>
